<compile_context>
chip_gen: v7x
topology: tpu7x:2x2x1
jax: 0.10.0
libtpu: 0.0.40
codegen_flags: <defaults>
</compile_context>

<pallas_src>
import jax
import jax.numpy as jnp
from jax.experimental import pallas as pl
from jax.experimental.pallas import tpu as pltpu


_TILE_M = 2048  # batch tile (multiple of 8); review: 2048-4096 amortizes grid-step overhead


# ---------------------------------------------------------------------------
# Kernel: 4 fused block-diagonal matmuls over one batch tile.
# ---------------------------------------------------------------------------
def network_kernel(x_ref, eps_ref, w_ref, w4_ref, b_ref, out_ref):
    f32 = jnp.float32
    x = x_ref[...]                       # [TM, 58]  (x_str lanes 0:4, x_ele 4:58)
    eps = eps_ref[...]                   # [TM, 20]  (eps1 | eps2)
    b = b_ref[...]                       # [8, 128]  bias rows

    # Dot 1: encoder hidden, both branches block-diagonally (enc1 hid 0:5,
    # enc2 hid 5:40).  K = 58 (no zero-padded reduction rows).
    w1 = w_ref[0:58, :]                  # [58, 128]
    h = jnp.dot(x, w1, preferred_element_type=f32) + b[0:1, :]
    h = jnp.maximum(h, 0.0)

    # Dot 2: encoder output -> lanes [mu1 0:10 | mu2 10:20 | lv1 20:30 | lv2 30:40].
    # Dead K rows trimmed: only the 40 valid hidden lanes feed the MXU.
    w2 = w_ref[64:104, :]                # [40, 128]
    g = jnp.dot(h[:, 0:40], w2, preferred_element_type=f32) + b[1:2, :]

    # Reparameterize both branches at once (no concat(z1, z2) needed).
    z = g[:, 0:20] + jnp.exp(0.5 * g[:, 20:40]) * eps        # [TM, 20]

    # Dot 3: decoder hidden (both branches) + fc head as (+fc, -fc) columns at
    # lanes 40/41; lane 47 is a constant-1 "bias lane" (zero column + bias 1).
    w3 = w_ref[104:124, :]               # [20, 128]
    d = jnp.dot(z, w3, preferred_element_type=f32) + b[2:3, :]
    d = jnp.maximum(d, 0.0)

    # Dot 4: 64-lane output slab (pred @ 0, rx1 @ 1:5, rx2 @ 5:59).  The output
    # bias rides on W4 row 47 via the constant-1 lane, so no extra add.
    out_ref[...] = jnp.dot(d[:, 0:48], w4_ref[...], preferred_element_type=f32)


# ---------------------------------------------------------------------------
# Parameter init (torch nn.Linear layout: W [out, in], b [out]).
# ---------------------------------------------------------------------------
def init_params(key):
    dims = {
        "e1w1": (5, 4),   "e1b1": (5,),
        "e1w2": (20, 5),  "e1b2": (20,),
        "e2w1": (35, 54), "e2b1": (35,),
        "e2w2": (20, 35), "e2b2": (20,),
        "d1w1": (5, 10),  "d1b1": (5,),
        "d1w2": (4, 5),   "d1b2": (4,),
        "d2w1": (35, 10), "d2b1": (35,),
        "d2w2": (54, 35), "d2b2": (54,),
        "fcw": (1, 20),   "fcb": (1,),
    }
    params = {}
    for name, shape in dims.items():
        key, sub = jax.random.split(key)
        params[name] = 0.1 * jax.random.normal(sub, shape, dtype=jnp.float32)
    return params


# ---------------------------------------------------------------------------
# Wrapper-side packing: block-diagonal fusion + bias slab (layout work done
# once, outside the kernel).
# ---------------------------------------------------------------------------
def pack_params(p):
    # Main weight slab [128, 128]:
    #   rows   0: 58  W1 : x[58]        -> enc hidden lanes 0:40
    #   rows  64:104  W2 : enc hid[40]  -> [mu1|mu2|lv1|lv2] lanes 0:40
    #   rows 104:124  W3 : z[20]        -> dec hidden 0:40, +fc@40, -fc@41
    W = jnp.zeros((128, 128), jnp.float32)
    W = W.at[0:4, 0:5].set(p["e1w1"].T)
    W = W.at[4:58, 5:40].set(p["e2w1"].T)

    e1 = p["e1w2"].T                      # [5, 20]  = [mu1 | lv1]
    e2 = p["e2w2"].T                      # [35, 20] = [mu2 | lv2]
    W = W.at[64:69, 0:10].set(e1[:, 0:10])
    W = W.at[64:69, 20:30].set(e1[:, 10:20])
    W = W.at[69:104, 10:20].set(e2[:, 0:10])
    W = W.at[69:104, 30:40].set(e2[:, 10:20])

    W = W.at[104:114, 0:5].set(p["d1w1"].T)
    W = W.at[114:124, 5:40].set(p["d2w1"].T)
    fcT = p["fcw"].T                      # [20, 1]
    W = W.at[104:124, 40:41].set(fcT)
    W = W.at[104:124, 41:42].set(-fcT)

    # W4 slab [48, 64]: dec-hidden lanes 0:48 -> output lanes (pred@0,
    # rx1@1:5, rx2@5:59).  Row 47 carries the output bias (constant-1 lane).
    W4 = jnp.zeros((48, 64), jnp.float32)
    W4 = W4.at[0:5, 1:5].set(p["d1w2"].T)
    W4 = W4.at[5:40, 5:59].set(p["d2w2"].T)
    W4 = W4.at[40, 0].set(1.0)            # relu(s) - relu(-s) = s
    W4 = W4.at[41, 0].set(-1.0)
    W4 = W4.at[47, 1:5].set(p["d1b2"])
    W4 = W4.at[47, 5:59].set(p["d2b2"])

    # Bias slab [8, 128]: rows 0 (enc hid), 1 (enc out), 2 (dec hid + fc +/-,
    # plus 1.0 at lane 47 to create the constant-1 decoder lane).
    b = jnp.zeros((8, 128), jnp.float32)
    b = b.at[0, 0:5].set(p["e1b1"]).at[0, 5:40].set(p["e2b1"])
    b = b.at[1, 0:10].set(p["e1b2"][0:10]).at[1, 10:20].set(p["e2b2"][0:10])
    b = b.at[1, 20:30].set(p["e1b2"][10:20]).at[1, 30:40].set(p["e2b2"][10:20])
    b = b.at[2, 0:5].set(p["d1b1"]).at[2, 5:40].set(p["d2b1"])
    b = b.at[2, 40].set(p["fcb"][0]).at[2, 41].set(-p["fcb"][0])
    b = b.at[2, 47].set(1.0)
    return W, W4, b


# ---------------------------------------------------------------------------
# Forward wrapper: ragged batch grid, no input padding, 64-lane output slab.
# ---------------------------------------------------------------------------
def _round_up(n, m):
    return ((n + m - 1) // m) * m


@jax.jit
def network_forward(x, eps, w_pack, w4_pack, b_pack):
    B = x.shape[0]
    # Tile: multiple of 8, capped at _TILE_M; picked so the grid has >= 2
    # steps whenever B allows (both TensorCores busy on v7x).
    TM = max(8, min(_TILE_M, _round_up(pl.cdiv(B, 2), 8)))
    grid = (pl.cdiv(B, TM),)

    out = pl.pallas_call(
        network_kernel,
        out_shape=jax.ShapeDtypeStruct((B, 64), jnp.float32),
        grid=grid,
        in_specs=[
            pl.BlockSpec((TM, 58), lambda i: (i, 0)),          # x (ragged tail masked)
            pl.BlockSpec((TM, 20), lambda i: (i, 0)),          # eps
            pl.BlockSpec((128, 128), lambda i: (0, 0)),        # resident W1/W2/W3 slab
            pl.BlockSpec((48, 64), lambda i: (0, 0)),          # resident W4 slab
            pl.BlockSpec((8, 128), lambda i: (0, 0)),          # resident bias slab
        ],
        out_specs=pl.BlockSpec((TM, 64), lambda i: (i, 0)),
        compiler_params=pltpu.CompilerParams(
            dimension_semantics=("parallel",),
            vmem_limit_bytes=32 * 1024 * 1024),
    )(x, eps, w_pack, w4_pack, b_pack)

    pred = out[:, 0:1]
    rx1 = out[:, 1:5]
    rx2 = out[:, 5:59]
    return pred, rx1, rx2


# ---------------------------------------------------------------------------
# Pure-JAX reference (mirrors the PyTorch module exactly).
# ---------------------------------------------------------------------------
def reference_forward(x, eps1, eps2, p):
    def seq(a, w1, b1, w2, b2):
        return jnp.maximum(a @ w1.T + b1, 0.0) @ w2.T + b2
    x_str, x_ele = x[:, :4], x[:, 4:]
    h1 = seq(x_str, p["e1w1"], p["e1b1"], p["e1w2"], p["e1b2"])
    z1 = h1[:, :10] + jnp.exp(0.5 * h1[:, 10:]) * eps1
    rx1 = seq(z1, p["d1w1"], p["d1b1"], p["d1w2"], p["d1b2"])
    h2 = seq(x_ele, p["e2w1"], p["e2b1"], p["e2w2"], p["e2b2"])
    z2 = h2[:, :10] + jnp.exp(0.5 * h2[:, 10:]) * eps2
    rx2 = seq(z2, p["d2w1"], p["d2b1"], p["d2w2"], p["d2b2"])
    z = jnp.concatenate([z1, z2], axis=1)
    pred = z @ p["fcw"].T + p["fcb"]
    return pred, rx1, rx2


if __name__ == "__main__":
    key = jax.random.PRNGKey(0)
    k_params, k_x, k_eps = jax.random.split(key, 3)

    params = init_params(k_params)
    w_pack, w4_pack, b_pack = pack_params(params)

    # Two small batches: an exact tile (B=8) and a ragged multi-step batch
    # (B=13 -> TM=8, grid=2, partial last tile) to exercise the masked path.
    for B in (8, 13):
        kx, ke = jax.random.fold_in(k_x, B), jax.random.fold_in(k_eps, B)
        x = jax.random.normal(kx, (B, 58), dtype=jnp.float32)     # 4 str + 54 ele
        eps = jax.random.normal(ke, (B, 20), dtype=jnp.float32)   # eps1 | eps2

        pred, rx1, rx2 = network_forward(x, eps, w_pack, w4_pack, b_pack)
        jax.block_until_ready((pred, rx1, rx2))

        ref_pred, ref_rx1, ref_rx2 = reference_forward(
            x, eps[:, 0:10], eps[:, 10:20], params)
        assert jnp.allclose(pred, ref_pred, atol=1e-5, rtol=1e-5), "predict mismatch"
        assert jnp.allclose(rx1, ref_rx1, atol=1e-5, rtol=1e-5), "recon_x1 mismatch"
        assert jnp.allclose(rx2, ref_rx2, atol=1e-5, rtol=1e-5), "recon_x2 mismatch"

    # TODO(synk): KLD terms are computed but not returned by the PyTorch forward,
    # so they are intentionally omitted here.
    print("KERNEL_OK")
</pallas_src>

<mosaic_0001>
module attributes {stable_mosaic.version = 11 : i64} {
  func.func @network_kernel(%arg0: i32, %arg1: memref<8x58xf32, #tpu.memory_space<vmem>>, %arg2: memref<8x20xf32, #tpu.memory_space<vmem>>, %arg3: memref<128x128xf32, #tpu.memory_space<vmem>>, %arg4: memref<48x64xf32, #tpu.memory_space<vmem>>, %arg5: memref<8x128xf32, #tpu.memory_space<vmem>>, %arg6: memref<8x64xf32, #tpu.memory_space<vmem>>) attributes {dimension_semantics = [#tpu.dimension_semantics<parallel>], iteration_bounds = array<i64: 1>, scalar_prefetch = 0 : i64, scratch_operands = 0 : i64, tpu.core_type = #tpu.core_type<tc>, window_params = [{transform_indices = @transform_0, window_bounds = array<i64: 8, 58>}, {transform_indices = @transform_1, window_bounds = array<i64: 8, 20>}, {pipeline_mode = #tpu.pipeline_mode<synchronous>, transform_indices = @transform_2, window_bounds = array<i64: 128, 128>}, {pipeline_mode = #tpu.pipeline_mode<synchronous>, transform_indices = @transform_3, window_bounds = array<i64: 48, 64>}, {pipeline_mode = #tpu.pipeline_mode<synchronous>, transform_indices = @transform_4, window_bounds = array<i64: 8, 128>}, {transform_indices = @transform_5, window_bounds = array<i64: 8, 64>}]} {
    %c0 = arith.constant 0 : index
    %c0_0 = arith.constant 0 : index
    %0 = vector.load %arg1[%c0, %c0_0] : memref<8x58xf32, #tpu.memory_space<vmem>>, vector<8x58xf32>
    %c0_1 = arith.constant 0 : index
    %c0_2 = arith.constant 0 : index
    %1 = vector.load %arg2[%c0_1, %c0_2] : memref<8x20xf32, #tpu.memory_space<vmem>>, vector<8x20xf32>
    %c0_3 = arith.constant 0 : index
    %c0_4 = arith.constant 0 : index
    %2 = vector.load %arg5[%c0_3, %c0_4] : memref<8x128xf32, #tpu.memory_space<vmem>>, vector<8x128xf32>
    %c0_5 = arith.constant 0 : index
    %c0_6 = arith.constant 0 : index
    %3 = vector.load %arg3[%c0_5, %c0_6] : memref<128x128xf32, #tpu.memory_space<vmem>>, vector<58x128xf32>
    %cst = arith.constant dense<0.000000e+00> : vector<8x128xf32>
    %4 = tpu.matmul %0, %3, %cst {dimension_numbers = #tpu.dot_dimension_numbers<[1], [0], [0], [1], [0, 0, 1, 1], [], []>} : vector<8x58xf32>, vector<58x128xf32>, vector<8x128xf32> -> vector<8x128xf32>
    %5 = vector.extract_strided_slice %2 {offsets = [0, 0], sizes = [1, 128], strides = [1, 1]} : vector<8x128xf32> to vector<1x128xf32>
    %6 = vector.broadcast %5 : vector<1x128xf32> to vector<8x128xf32>
    %7 = arith.addf %4, %6 : vector<8x128xf32>
    %cst_7 = arith.constant 0.000000e+00 : f32
    %8 = vector.broadcast %cst_7 : f32 to vector<8x128xf32>
    %9 = arith.maximumf %7, %8 : vector<8x128xf32>
    %c64 = arith.constant 64 : index
    %c0_8 = arith.constant 0 : index
    %10 = vector.load %arg3[%c64, %c0_8] : memref<128x128xf32, #tpu.memory_space<vmem>>, vector<40x128xf32>
    %11 = vector.extract_strided_slice %9 {offsets = [0, 0], sizes = [8, 40], strides = [1, 1]} : vector<8x128xf32> to vector<8x40xf32>
    %cst_9 = arith.constant dense<0.000000e+00> : vector<8x128xf32>
    %12 = tpu.matmul %11, %10, %cst_9 {dimension_numbers = #tpu.dot_dimension_numbers<[1], [0], [0], [1], [0, 0, 1, 1], [], []>} : vector<8x40xf32>, vector<40x128xf32>, vector<8x128xf32> -> vector<8x128xf32>
    %13 = vector.extract_strided_slice %2 {offsets = [1, 0], sizes = [1, 128], strides = [1, 1]} : vector<8x128xf32> to vector<1x128xf32>
    %14 = vector.broadcast %13 : vector<1x128xf32> to vector<8x128xf32>
    %15 = arith.addf %12, %14 : vector<8x128xf32>
    %16 = vector.extract_strided_slice %15 {offsets = [0, 0], sizes = [8, 20], strides = [1, 1]} : vector<8x128xf32> to vector<8x20xf32>
    %17 = vector.extract_strided_slice %15 {offsets = [0, 20], sizes = [8, 20], strides = [1, 1]} : vector<8x128xf32> to vector<8x20xf32>
    %cst_10 = arith.constant 5.000000e-01 : f32
    %18 = vector.broadcast %cst_10 : f32 to vector<8x20xf32>
    %19 = arith.mulf %18, %17 : vector<8x20xf32>
    %20 = math.exp %19 : vector<8x20xf32>
    %21 = arith.mulf %20, %1 : vector<8x20xf32>
    %22 = arith.addf %16, %21 : vector<8x20xf32>
    %c104 = arith.constant 104 : index
    %c0_11 = arith.constant 0 : index
    %23 = vector.load %arg3[%c104, %c0_11] : memref<128x128xf32, #tpu.memory_space<vmem>>, vector<20x128xf32>
    %cst_12 = arith.constant dense<0.000000e+00> : vector<8x128xf32>
    %24 = tpu.matmul %22, %23, %cst_12 {dimension_numbers = #tpu.dot_dimension_numbers<[1], [0], [0], [1], [0, 0, 1, 1], [], []>} : vector<8x20xf32>, vector<20x128xf32>, vector<8x128xf32> -> vector<8x128xf32>
    %25 = vector.extract_strided_slice %2 {offsets = [2, 0], sizes = [1, 128], strides = [1, 1]} : vector<8x128xf32> to vector<1x128xf32>
    %26 = vector.broadcast %25 : vector<1x128xf32> to vector<8x128xf32>
    %27 = arith.addf %24, %26 : vector<8x128xf32>
    %cst_13 = arith.constant 0.000000e+00 : f32
    %28 = vector.broadcast %cst_13 : f32 to vector<8x128xf32>
    %29 = arith.maximumf %27, %28 : vector<8x128xf32>
    %30 = vector.extract_strided_slice %29 {offsets = [0, 0], sizes = [8, 48], strides = [1, 1]} : vector<8x128xf32> to vector<8x48xf32>
    %c0_14 = arith.constant 0 : index
    %c0_15 = arith.constant 0 : index
    %31 = vector.load %arg4[%c0_14, %c0_15] : memref<48x64xf32, #tpu.memory_space<vmem>>, vector<48x64xf32>
    %cst_16 = arith.constant dense<0.000000e+00> : vector<8x64xf32>
    %32 = tpu.matmul %30, %31, %cst_16 {dimension_numbers = #tpu.dot_dimension_numbers<[1], [0], [0], [1], [0, 0, 1, 1], [], []>} : vector<8x48xf32>, vector<48x64xf32>, vector<8x64xf32> -> vector<8x64xf32>
    %c0_17 = arith.constant 0 : index
    %c0_18 = arith.constant 0 : index
    %33 = vector.load %arg6[%c0_17, %c0_18] : memref<8x64xf32, #tpu.memory_space<vmem>>, vector<8x64xf32>
    tpu.vector_store %arg6[%c0_17, %c0_18], %32 {strides = array<i32>} : memref<8x64xf32, #tpu.memory_space<vmem>>, vector<8x64xf32>,
    return
  }
  func.func @transform_0(%arg0: i32) -> (i32, i32) {
    %c0_i32 = arith.constant 0 : i32
    %c0_i32_0 = arith.constant 0 : i32
    return %arg0, %c0_i32 : i32, i32
  }
  func.func @transform_1(%arg0: i32) -> (i32, i32) {
    %c0_i32 = arith.constant 0 : i32
    %c0_i32_0 = arith.constant 0 : i32
    return %arg0, %c0_i32 : i32, i32
  }
  func.func @transform_2(%arg0: i32) -> (i32, i32) {
    %c0_i32 = arith.constant 0 : i32
    %c0_i32_0 = arith.constant 0 : i32
    %c0_i32_1 = arith.constant 0 : i32
    return %c0_i32, %c0_i32_0 : i32, i32
  }
  func.func @transform_3(%arg0: i32) -> (i32, i32) {
    %c0_i32 = arith.constant 0 : i32
    %c0_i32_0 = arith.constant 0 : i32
    %c0_i32_1 = arith.constant 0 : i32
    return %c0_i32, %c0_i32_0 : i32, i32
  }
  func.func @transform_4(%arg0: i32) -> (i32, i32) {
    %c0_i32 = arith.constant 0 : i32
    %c0_i32_0 = arith.constant 0 : i32
    %c0_i32_1 = arith.constant 0 : i32
    return %c0_i32, %c0_i32_0 : i32, i32
  }
  func.func @transform_5(%arg0: i32) -> (i32, i32) {
    %c0_i32 = arith.constant 0 : i32
    %c0_i32_0 = arith.constant 0 : i32
    return %arg0, %c0_i32 : i32, i32
  }
}

</mosaic_0001>

<llo_original>
// kernel: network_forward.1
$region0: #{network_forward.1}
  #allocation0 [shape = 'u32[]', space=smem, size = 0x4, offset = 0x4, fixed_abs, tag = 'smem constant byte address 0x4 - core index']
  #allocation1 [shape = 'u32[144,128]{1,0:T(1,128)}', space=vmem, size = 0x12000, scoped, tag = 'internal scratch']
  %s0 = inlined_call_operand.hbm [shape: f32[8,58], index: 0, kind: input, shape index: {}]
  %s1 = inlined_call_operand.vmem [shape: f32[8,20], index: 1, kind: input, shape index: {}]
  %s2 = inlined_call_operand.hbm [shape: f32[128,128], index: 2, kind: input, shape index: {}]
  %s3 = inlined_call_operand.hbm [shape: f32[48,64], index: 3, kind: input, shape index: {}]
  %s4 = inlined_call_operand.hbm [shape: f32[8,128], index: 4, kind: input, shape index: {}]
  %s5 = inlined_call_operand.vmem [shape: f32[8,64], index: 5, kind: output, shape index: {}]
  %s6 = sld [smem:[#allocation0]]
  $region46: #{network_forward.1} parent=0
    _
  %s8 = ssub.s32 1, %s6
  %s9 = scalar_select 0, %s8, %s6
  $region1: #{network_forward.1} parent=0
    #allocation2 [shape = 'u8[4096]{0}', space=vmem, size = 0x1000, scoped, tag = 'input window, operand 0, single buffered']
    #allocation3 [shape = 's32[1]{0}', space=sflag, size = 0x4, scoped, tag = 'scoped memory for network_forward.1']
    #allocation4 [shape = 'u8[65536]{0}', space=vmem, size = 0x10000, scoped, tag = 'input window, operand 2, single buffered']
    #allocation5 [shape = 's32[1]{0}', space=sflag, size = 0x4, scoped, tag = 'scoped memory for network_forward.1']
    #allocation6 [shape = 'u8[24576]{0}', space=vmem, size = 0x6000, scoped, tag = 'input window, operand 3, single buffered']
    #allocation7 [shape = 'u8[4096]{0}', space=vmem, size = 0x1000, scoped, tag = 'input window, operand 4, single buffered']
    #allocation8 [shape = 's32[1]{0}', space=sflag, size = 0x4, scoped, tag = 'scoped memory for network_forward.1']
    %10 = vsyncpa [#allocation3], 0
    %11 = vsyncpa [#allocation5], 0
    %12 = vsyncpa [#allocation8], 0
    // Predicated region
    $region2: #{network_forward.1} parent=1 // pred_check
      _
    $region3: #{network_forward.1} parent=1 // pred_check_branch
      %14 = sbr.rel (0) target = $region5
    $region4: #{network_forward.1} parent=1 // pred_region
      %s16 = ssub.s32 128, 128
      %17 = vsyncadd [#allocation3], %s16
      %s19 = sshll.u32 [#allocation2], 4
      %s20 = int_to_ptr.vmem [resolvable:$true] %s19
      %22 = dma.hbm_to_vmem [thread:$0]  %s0, 128, %s20, [#allocation3]
    $region5: #{network_forward.1} parent=1 // pred_fallthru
      _
    // Predicated region
    $region6: #{network_forward.1} parent=1 // pred_check
      _
    $region7: #{network_forward.1} parent=1 // pred_check_branch
      %24 = sbr.rel (0) target = $region9
    $region8: #{network_forward.1} parent=1 // pred_region
      _
    $region9: #{network_forward.1} parent=1 // pred_fallthru
      _
    // Predicated region
    $region10: #{network_forward.1} parent=1 // pred_check
      _
    $region11: #{network_forward.1} parent=1 // pred_check_branch
      %26 = sbr.rel (0) target = $region13
    $region12: #{network_forward.1} parent=1 // pred_region
      %s28 = ssub.s32 2048, 2048
      %29 = vsyncadd [#allocation5], %s28
      %s30 = sshll.u32 [#allocation4], 4
      %s31 = int_to_ptr.vmem [resolvable:$true] %s30
      %36 = dma.hbm_to_vmem [thread:$0]  %s2, 2048, %s31, [#allocation5], 128, 128, 8
    $region13: #{network_forward.1} parent=1 // pred_fallthru
      _
    // Predicated region
    $region14: #{network_forward.1} parent=1 // pred_check
      _
    $region15: #{network_forward.1} parent=1 // pred_check_branch
      %38 = sbr.rel (0) target = $region17
    $region16: #{network_forward.1} parent=1 // pred_region
      %s40 = ssub.s32 768, 768
      %41 = vsyncadd [#allocation5], %s40
      %s42 = sshll.u32 [#allocation6], 4
      %s43 = int_to_ptr.vmem [resolvable:$true] %s42
      %48 = dma.hbm_to_vmem [thread:$0]  %s3, 768, %s43, [#allocation5], 128, 128, 8
    $region17: #{network_forward.1} parent=1 // pred_fallthru
      _
    // Predicated region
    $region18: #{network_forward.1} parent=1 // pred_check
      _
    $region19: #{network_forward.1} parent=1 // pred_check_branch
      %50 = sbr.rel (0) target = $region21
    $region20: #{network_forward.1} parent=1 // pred_region
      %s52 = ssub.s32 128, 128
      %53 = vsyncadd [#allocation8], %s52
      %s55 = sshll.u32 [#allocation7], 4
      %s56 = int_to_ptr.vmem [resolvable:$true] %s55
      %58 = dma.hbm_to_vmem [thread:$0]  %s4, 128, %s56, [#allocation8]
    $region21: #{network_forward.1} parent=1 // pred_fallthru
      _
    // Predicated region
    $region22: #{network_forward.1} parent=1 // pred_check
      _
    $region23: #{network_forward.1} parent=1 // pred_check_branch
      %60 = sbr.rel (0) target = $region25
    $region24: #{network_forward.1} parent=1 // pred_region
      %61 = dma.done [#allocation3], 128
    $region25: #{network_forward.1} parent=1 // pred_fallthru
      _
    // Predicated region
    $region26: #{network_forward.1} parent=1 // pred_check
      _
    $region27: #{network_forward.1} parent=1 // pred_check_branch
      %63 = sbr.rel (0) target = $region29
    $region28: #{network_forward.1} parent=1 // pred_region
      %64 = dma.done [#allocation5], 2048
    $region29: #{network_forward.1} parent=1 // pred_fallthru
      _
    // Predicated region
    $region30: #{network_forward.1} parent=1 // pred_check
      _
    $region31: #{network_forward.1} parent=1 // pred_check_branch
      %66 = sbr.rel (0) target = $region33
    $region32: #{network_forward.1} parent=1 // pred_region
      %67 = dma.done [#allocation5], 768
    $region33: #{network_forward.1} parent=1 // pred_fallthru
      _
    // Predicated region
    $region34: #{network_forward.1} parent=1 // pred_check
      _
    $region35: #{network_forward.1} parent=1 // pred_check_branch
      %69 = sbr.rel (0) target = $region37
    $region36: #{network_forward.1} parent=1 // pred_region
      %70 = dma.done [#allocation8], 128
    $region37: #{network_forward.1} parent=1 // pred_fallthru
      _
    %v71 = vld [vmem:[#allocation2] sm:$0xff]
    %v72 = vld [vmem:[%s1] sm:$0xff]
    %v73 = vld [vmem:[#allocation7] sm:$0xff]
    %v74 = vld [vmem:[#allocation4] sm:$0xff]
    %v75 = vld [vmem:[#allocation4 + $0x8] sm:$0xff]
    %v76 = vld [vmem:[#allocation4 + $0x10] sm:$0xff]
    %v77 = vld [vmem:[#allocation4 + $0x18] sm:$0xff]
    %v78 = vld [vmem:[#allocation4 + $0x20] sm:$0xff]
    %v79 = vld [vmem:[#allocation4 + $0x28] sm:$0xff]
    %v80 = vld [vmem:[#allocation4 + $0x30] sm:$0xff]
    %v81 = vld [vmem:[#allocation4 + $0x38] sm:$0x3]
    %v82 = vlaneseq
    %v83 = vshrl.u32 %v82, 7
    %v84 = vsub.s32 0, %v83
    %v85 = vrot.slane %v73, %v84
    %vm86 = vcmask 474112
    %v88 = vsel %vm86, %v71, 0
    %vm90 = vcmask 1041408
    %v92 = vsel %vm90, %v81, 0
    %94 = vmatprep.subr.mxu0 0.0
    %95 = vmatpush1.msra.mxu0 %v74
    %96 = vmatprep.subr.mxu0 0.0
    %97 = vmatpush1.msra.mxu0 %v75
    %98 = vmatprep.subr.mxu0 0.0
    %99 = vmatpush1.msra.mxu0 %v76
    %100 = vmatprep.subr.mxu0 0.0
    %101 = vmatpush1.msra.mxu0 %v77
    %102 = vmatprep.subr.mxu0 0.0
    %103 = vmatpush1.msra.mxu0 %v78
    %104 = vmatprep.subr.mxu0 0.0
    %105 = vmatpush1.msra.mxu0 %v79
    %106 = vmatprep.subr.mxu0 0.0
    %107 = vmatpush1.msra.mxu0 %v80
    %108 = vmatprep.subr.mxu0 0.0
    %109 = vmatpush1.msra.mxu0 %v92
    %110 = vmatprep.subr.mxu0 0.0
    %111 = vmatpush1.msra.mxu0 0.0
    %112 = vmatprep.subr.mxu0 0.0
    %113 = vmatpush1.msra.mxu0 0.0
    %114 = vmatprep.subr.mxu0 0.0
    %115 = vmatpush1.msra.mxu0 0.0
    %116 = vmatprep.subr.mxu0 0.0
    %117 = vmatpush1.msra.mxu0 0.0
    %118 = vmatprep.subr.mxu0 0.0
    %119 = vmatpush1.msra.mxu0 0.0
    %120 = vmatprep.subr.mxu0 0.0
    %121 = vmatpush1.msra.mxu0 0.0
    %122 = vmatprep.subr.mxu0 0.0
    %123 = vmatpush1.msra.mxu0 0.0
    %124 = vmatprep.subr.mxu0 0.0
    %125 = vmatpush1.msra.mxu0 0.0
    %126 = vmatprep.subr.mxu0 0.0
    %127 = vmatpush1.msra.mxu0 0.0
    %128 = vmatprep.subr.mxu0 0.0
    %129 = vmatpush1.msra.mxu0 0.0
    %130 = vmatprep.subr.mxu0 0.0
    %131 = vmatpush1.msra.mxu0 0.0
    %132 = vmatprep.subr.mxu0 0.0
    %133 = vmatpush1.msra.mxu0 0.0
    %134 = vmatprep.subr.mxu0 0.0
    %135 = vmatpush1.msra.mxu0 0.0
    %136 = vmatprep.subr.mxu0 0.0
    %137 = vmatpush1.msra.mxu0 0.0
    %138 = vmatprep.subr.mxu0 0.0
    %139 = vmatpush1.msra.mxu0 0.0
    %140 = vmatprep.subr.mxu0 0.0
    %141 = vmatpush1.msra.mxu0 0.0
    %142 = vmatprep.subr.mxu0 0.0
    %143 = vmatpush1.msra.mxu0 0.0
    %144 = vmatprep.subr.mxu0 0.0
    %145 = vmatpush1.msra.mxu0 0.0
    %146 = vmatprep.subr.mxu0 0.0
    %147 = vmatpush1.msra.mxu0 0.0
    %148 = vmatprep.subr.mxu0 0.0
    %149 = vmatpush1.msra.mxu0 0.0
    %150 = vmatprep.subr.mxu0 0.0
    %151 = vmatpush1.msra.mxu0 0.0
    %152 = vmatprep.subr.mxu0 0.0
    %153 = vmatpush1.msra.mxu0 0.0
    %154 = vmatprep.subr.mxu0 0.0
    %155 = vmatpush1.msra.mxu0 0.0
    %156 = vmatprep.subr.mxu0 0.0
    %157 = vmatpush1.msra.mxu0 0.0
    %158 = vmatprep.mubr.f32.mxu0 0.0
    %159 = vmatmul.mubr.f32.gmra.mrb[0].mxu0 %v88
    %v160 = vpop.f32.mrb[0].mxu0
    %v161 = vadd.f32 %v85, %v160
    %v162 = vpop.f32.mrb[0].mxu0
    %163 = vdwg.mxu0
    %v164 = vmax.f32 %v161, 0.0
    %v165 = vld [vmem:[#allocation4 + $0x40] sm:$0xff]
    %v166 = vld [vmem:[#allocation4 + $0x48] sm:$0xff]
    %v167 = vld [vmem:[#allocation4 + $0x50] sm:$0xff]
    %v168 = vld [vmem:[#allocation4 + $0x58] sm:$0xff]
    %v169 = vld [vmem:[#allocation4 + $0x60] sm:$0xff]
    %v170 = vlaneseq
    %v171 = vshrl.u32 %v170, 7
    %v172 = vsub.s32 1, %v171
    %v173 = vrot.slane %v73, %v172
    %vm174 = vcmask 326656
    %v176 = vsel %vm174, %v164, 0
    %178 = vmatprep.subr.mxu0 0.0
    %179 = vmatpush1.msra.mxu0 %v165
    %180 = vmatprep.subr.mxu0 0.0
    %181 = vmatpush1.msra.mxu0 %v166
    %182 = vmatprep.subr.mxu0 0.0
    %183 = vmatpush1.msra.mxu0 %v167
    %184 = vmatprep.subr.mxu0 0.0
    %185 = vmatpush1.msra.mxu0 %v168
    %186 = vmatprep.subr.mxu0 0.0
    %187 = vmatpush1.msra.mxu0 %v169
    %188 = vmatprep.subr.mxu0 0.0
    %189 = vmatpush1.msra.mxu0 0.0
    %190 = vmatprep.subr.mxu0 0.0
    %191 = vmatpush1.msra.mxu0 0.0
    %192 = vmatprep.subr.mxu0 0.0
    %193 = vmatpush1.msra.mxu0 0.0
    %194 = vmatprep.subr.mxu0 0.0
    %195 = vmatpush1.msra.mxu0 0.0
    %196 = vmatprep.subr.mxu0 0.0
    %197 = vmatpush1.msra.mxu0 0.0
    %198 = vmatprep.subr.mxu0 0.0
    %199 = vmatpush1.msra.mxu0 0.0
    %200 = vmatprep.subr.mxu0 0.0
    %201 = vmatpush1.msra.mxu0 0.0
    %202 = vmatprep.subr.mxu0 0.0
    %203 = vmatpush1.msra.mxu0 0.0
    %204 = vmatprep.subr.mxu0 0.0
    %205 = vmatpush1.msra.mxu0 0.0
    %206 = vmatprep.subr.mxu0 0.0
    %207 = vmatpush1.msra.mxu0 0.0
    %208 = vmatprep.subr.mxu0 0.0
    %209 = vmatpush1.msra.mxu0 0.0
    %210 = vmatprep.subr.mxu0 0.0
    %211 = vmatpush1.msra.mxu0 0.0
    %212 = vmatprep.subr.mxu0 0.0
    %213 = vmatpush1.msra.mxu0 0.0
    %214 = vmatprep.subr.mxu0 0.0
    %215 = vmatpush1.msra.mxu0 0.0
    %216 = vmatprep.subr.mxu0 0.0
    %217 = vmatpush1.msra.mxu0 0.0
    %218 = vmatprep.subr.mxu0 0.0
    %219 = vmatpush1.msra.mxu0 0.0
    %220 = vmatprep.subr.mxu0 0.0
    %221 = vmatpush1.msra.mxu0 0.0
    %222 = vmatprep.subr.mxu0 0.0
    %223 = vmatpush1.msra.mxu0 0.0
    %224 = vmatprep.subr.mxu0 0.0
    %225 = vmatpush1.msra.mxu0 0.0
    %226 = vmatprep.subr.mxu0 0.0
    %227 = vmatpush1.msra.mxu0 0.0
    %228 = vmatprep.subr.mxu0 0.0
    %229 = vmatpush1.msra.mxu0 0.0
    %230 = vmatprep.subr.mxu0 0.0
    %231 = vmatpush1.msra.mxu0 0.0
    %232 = vmatprep.subr.mxu0 0.0
    %233 = vmatpush1.msra.mxu0 0.0
    %234 = vmatprep.subr.mxu0 0.0
    %235 = vmatpush1.msra.mxu0 0.0
    %236 = vmatprep.subr.mxu0 0.0
    %237 = vmatpush1.msra.mxu0 0.0
    %238 = vmatprep.subr.mxu0 0.0
    %239 = vmatpush1.msra.mxu0 0.0
    %240 = vmatprep.subr.mxu0 0.0
    %241 = vmatpush1.msra.mxu0 0.0
    %242 = vmatprep.mubr.f32.mxu0 0.0
    %243 = vmatmul.mubr.f32.gmra.mrb[0].mxu0 %v176
    %v244 = vpop.f32.mrb[0].mxu0
    %v245 = vadd.f32 %v173, %v244
    %v246 = vpop.f32.mrb[0].mxu0
    %247 = vdwg.mxu0
    %v248 = vmul.f32 %v245, 0.5
    %v249 = vmul.f32 %v248, 1.442695
    %v250 = vpow.pop %v249
    %252 = vrot.lane.b32.xlu0 %v72, 20
    %v253 = vpop.permute.xlu0 %252
    %v255 = vmul.f32 %v250, %v253
    %257 = vrot.lane.b32.xlu0 %v255, 108
    %v258 = vpop.permute.xlu0 %257
    %v260 = vadd.f32 %v245, %v258
    %v261 = vld [vmem:[#allocation4 + $0x68] sm:$0xff]
    %v262 = vld [vmem:[#allocation4 + $0x70] sm:$0xff]
    %v263 = vld [vmem:[#allocation4 + $0x78] sm:$0xf]
    %v264 = vlaneseq
    %v265 = vshrl.u32 %v264, 7
    %v266 = vsub.s32 2, %v265
    %v267 = vrot.slane %v73, %v266
    %vm268 = vcmask 162816
    %v270 = vsel %vm268, %v260, 0
    %vm272 = vcmask 1043456
    %v274 = vsel %vm272, %v263, 0
    %276 = vmatprep.subr.mxu0 0.0
    %277 = vmatpush1.msra.mxu0 %v261
    %278 = vmatprep.subr.mxu0 0.0
    %279 = vmatpush1.msra.mxu0 %v262
    %280 = vmatprep.subr.mxu0 0.0
    %281 = vmatpush1.msra.mxu0 %v274
    %282 = vmatprep.subr.mxu0 0.0
    %283 = vmatpush1.msra.mxu0 0.0
    %284 = vmatprep.subr.mxu0 0.0
    %285 = vmatpush1.msra.mxu0 0.0
    %286 = vmatprep.subr.mxu0 0.0
    %287 = vmatpush1.msra.mxu0 0.0
    %288 = vmatprep.subr.mxu0 0.0
    %289 = vmatpush1.msra.mxu0 0.0
    %290 = vmatprep.subr.mxu0 0.0
    %291 = vmatpush1.msra.mxu0 0.0
    %292 = vmatprep.subr.mxu0 0.0
    %293 = vmatpush1.msra.mxu0 0.0
    %294 = vmatprep.subr.mxu0 0.0
    %295 = vmatpush1.msra.mxu0 0.0
    %296 = vmatprep.subr.mxu0 0.0
    %297 = vmatpush1.msra.mxu0 0.0
    %298 = vmatprep.subr.mxu0 0.0
    %299 = vmatpush1.msra.mxu0 0.0
    %300 = vmatprep.subr.mxu0 0.0
    %301 = vmatpush1.msra.mxu0 0.0
    %302 = vmatprep.subr.mxu0 0.0
    %303 = vmatpush1.msra.mxu0 0.0
    %304 = vmatprep.subr.mxu0 0.0
    %305 = vmatpush1.msra.mxu0 0.0
    %306 = vmatprep.subr.mxu0 0.0
    %307 = vmatpush1.msra.mxu0 0.0
    %308 = vmatprep.subr.mxu0 0.0
    %309 = vmatpush1.msra.mxu0 0.0
    %310 = vmatprep.subr.mxu0 0.0
    %311 = vmatpush1.msra.mxu0 0.0
    %312 = vmatprep.subr.mxu0 0.0
    %313 = vmatpush1.msra.mxu0 0.0
    %314 = vmatprep.subr.mxu0 0.0
    %315 = vmatpush1.msra.mxu0 0.0
    %316 = vmatprep.subr.mxu0 0.0
    %317 = vmatpush1.msra.mxu0 0.0
    %318 = vmatprep.subr.mxu0 0.0
    %319 = vmatpush1.msra.mxu0 0.0
    %320 = vmatprep.subr.mxu0 0.0
    %321 = vmatpush1.msra.mxu0 0.0
    %322 = vmatprep.subr.mxu0 0.0
    %323 = vmatpush1.msra.mxu0 0.0
    %324 = vmatprep.subr.mxu0 0.0
    %325 = vmatpush1.msra.mxu0 0.0
    %326 = vmatprep.subr.mxu0 0.0
    %327 = vmatpush1.msra.mxu0 0.0
    %328 = vmatprep.subr.mxu0 0.0
    %329 = vmatpush1.msra.mxu0 0.0
    %330 = vmatprep.subr.mxu0 0.0
    %331 = vmatpush1.msra.mxu0 0.0
    %332 = vmatprep.subr.mxu0 0.0
    %333 = vmatpush1.msra.mxu0 0.0
    %334 = vmatprep.subr.mxu0 0.0
    %335 = vmatpush1.msra.mxu0 0.0
    %336 = vmatprep.subr.mxu0 0.0
    %337 = vmatpush1.msra.mxu0 0.0
    %338 = vmatprep.subr.mxu0 0.0
    %339 = vmatpush1.msra.mxu0 0.0
    %340 = vmatprep.mubr.f32.mxu0 0.0
    %341 = vmatmul.mubr.f32.gmra.mrb[0].mxu0 %v270
    %v342 = vpop.f32.mrb[0].mxu0
    %v343 = vadd.f32 %v267, %v342
    %v344 = vpop.f32.mrb[0].mxu0
    %345 = vdwg.mxu0
    %v346 = vmax.f32 %v343, 0.0
    %v347 = vld [vmem:[#allocation6] sm:$0xff]
    %v348 = vld [vmem:[#allocation6 + $0x8] sm:$0xff]
    %v349 = vld [vmem:[#allocation6 + $0x10] sm:$0xff]
    %v350 = vld [vmem:[#allocation6 + $0x18] sm:$0xff]
    %v351 = vld [vmem:[#allocation6 + $0x20] sm:$0xff]
    %v352 = vld [vmem:[#allocation6 + $0x28] sm:$0xff]
    %vm353 = vcmask 392192
    %v355 = vsel %vm353, %v346, 0
    %357 = vmatprep.subr.mxu0 0.0
    %358 = vmatpush1.msra.mxu0 %v347
    %359 = vmatprep.subr.mxu0 0.0
    %360 = vmatpush1.msra.mxu0 %v348
    %361 = vmatprep.subr.mxu0 0.0
    %362 = vmatpush1.msra.mxu0 %v349
    %363 = vmatprep.subr.mxu0 0.0
    %364 = vmatpush1.msra.mxu0 %v350
    %365 = vmatprep.subr.mxu0 0.0
    %366 = vmatpush1.msra.mxu0 %v351
    %367 = vmatprep.subr.mxu0 0.0
    %368 = vmatpush1.msra.mxu0 %v352
    %369 = vmatprep.subr.mxu0 0.0
    %370 = vmatpush1.msra.mxu0 0.0
    %371 = vmatprep.subr.mxu0 0.0
    %372 = vmatpush1.msra.mxu0 0.0
    %373 = vmatprep.subr.mxu0 0.0
    %374 = vmatpush1.msra.mxu0 0.0
    %375 = vmatprep.subr.mxu0 0.0
    %376 = vmatpush1.msra.mxu0 0.0
    %377 = vmatprep.subr.mxu0 0.0
    %378 = vmatpush1.msra.mxu0 0.0
    %379 = vmatprep.subr.mxu0 0.0
    %380 = vmatpush1.msra.mxu0 0.0
    %381 = vmatprep.subr.mxu0 0.0
    %382 = vmatpush1.msra.mxu0 0.0
    %383 = vmatprep.subr.mxu0 0.0
    %384 = vmatpush1.msra.mxu0 0.0
    %385 = vmatprep.subr.mxu0 0.0
    %386 = vmatpush1.msra.mxu0 0.0
    %387 = vmatprep.subr.mxu0 0.0
    %388 = vmatpush1.msra.mxu0 0.0
    %389 = vmatprep.subr.mxu0 0.0
    %390 = vmatpush1.msra.mxu0 0.0
    %391 = vmatprep.subr.mxu0 0.0
    %392 = vmatpush1.msra.mxu0 0.0
    %393 = vmatprep.subr.mxu0 0.0
    %394 = vmatpush1.msra.mxu0 0.0
    %395 = vmatprep.subr.mxu0 0.0
    %396 = vmatpush1.msra.mxu0 0.0
    %397 = vmatprep.subr.mxu0 0.0
    %398 = vmatpush1.msra.mxu0 0.0
    %399 = vmatprep.subr.mxu0 0.0
    %400 = vmatpush1.msra.mxu0 0.0
    %401 = vmatprep.subr.mxu0 0.0
    %402 = vmatpush1.msra.mxu0 0.0
    %403 = vmatprep.subr.mxu0 0.0
    %404 = vmatpush1.msra.mxu0 0.0
    %405 = vmatprep.subr.mxu0 0.0
    %406 = vmatpush1.msra.mxu0 0.0
    %407 = vmatprep.subr.mxu0 0.0
    %408 = vmatpush1.msra.mxu0 0.0
    %409 = vmatprep.subr.mxu0 0.0
    %410 = vmatpush1.msra.mxu0 0.0
    %411 = vmatprep.subr.mxu0 0.0
    %412 = vmatpush1.msra.mxu0 0.0
    %413 = vmatprep.subr.mxu0 0.0
    %414 = vmatpush1.msra.mxu0 0.0
    %415 = vmatprep.subr.mxu0 0.0
    %416 = vmatpush1.msra.mxu0 0.0
    %417 = vmatprep.subr.mxu0 0.0
    %418 = vmatpush1.msra.mxu0 0.0
    %419 = vmatprep.subr.mxu0 0.0
    %420 = vmatpush1.msra.mxu0 0.0
    %421 = vmatprep.mubr.f32.mxu0 0.0
    %422 = vmatmul.mubr.f32.gmra.mrb[0].mxu0 %v355
    %v423 = vpop.f32.mrb[0].mxu0
    %v424 = vadd.f32 0.0, %v423
    %v425 = vpop.f32.mrb[0].mxu0
    %426 = vdwg.mxu0
    %vm427 = vcmask 523264
    %428 = vst.msk [vmem:[%s5] sm:$0xff] %vm427, %v424
    // Predicated region
    $region38: #{network_forward.1} parent=1 // pred_check
      _
    $region39: #{network_forward.1} parent=1 // pred_check_branch
      %430 = sbr.rel (0) target = $region41
    $region40: #{network_forward.1} parent=1 // pred_region
      _
    $region41: #{network_forward.1} parent=1 // pred_fallthru
      _
    // Predicated region
    $region42: #{network_forward.1} parent=1 // pred_check
      _
    $region43: #{network_forward.1} parent=1 // pred_check_branch
      %432 = sbr.rel (0) target = $region45
    $region44: #{network_forward.1} parent=1 // pred_region
      _
    $region45: #{network_forward.1} parent=1 // pred_fallthru
      _
    %433 = vsyncpa [#allocation3], 1
    %434 = vsyncpa [#allocation5], 1
    %435 = vsyncpa [#allocation8], 1

</llo_original>
